<compile_context>
chip_gen: v5e
topology: v5e:2x2
jax: 0.10.0
libtpu: 0.0.40
codegen_flags: <defaults>
</compile_context>

<pallas_src>
import functools

import jax
import jax.numpy as jnp
from jax import lax
from jax.experimental import pallas as pl
from jax.experimental.pallas import tpu as pltpu

LANES = 128          # TPU lane width
D_IN = 784
D_H1 = 128
D_H2 = 64
D_OUT = 10


def mlp_kernel(x_ref, w1_ref, b1_ref, w2_ref, b2_ref, w3_ref, b3_ref, o_ref):
    # x tile: (TB, 784) in its HBM dtype; cast to bf16 in VMEM for the MXU.
    x = x_ref[...].astype(jnp.bfloat16)

    # hidden_1: Linear(784 -> 128) + ReLU   (f32 accumulation on the MXU)
    h1 = jnp.dot(x, w1_ref[...], preferred_element_type=jnp.float32) + b1_ref[...]
    h1 = jnp.maximum(h1, 0.0).astype(jnp.bfloat16)

    # hidden_2: Linear(128 -> 64), zero-padded to 128 lanes; ReLU keeps pads at 0.
    h2 = jnp.dot(h1, w2_ref[...], preferred_element_type=jnp.float32) + b2_ref[...]
    h2 = jnp.maximum(h2, 0.0).astype(jnp.bfloat16)

    # output: Linear(64 -> 10), zero-padded to 128 lanes.
    logits = jnp.dot(h2, w3_ref[...], preferred_element_type=jnp.float32) + b3_ref[...]

    # Mask padded logit columns so they don't corrupt max / sum(exp).
    # (Python float literal -> inline constant; no captured traced const.)
    col = lax.broadcasted_iota(jnp.int32, logits.shape, 1)
    logits = jnp.where(col < D_OUT, logits, -1e30)

    # Numerically stable log-softmax over the feature axis.
    m = jnp.max(logits, axis=1, keepdims=True)
    shifted = logits - m
    lse = jnp.log(jnp.sum(jnp.exp(shifted), axis=1, keepdims=True))
    o_ref[...] = (shifted - lse).astype(o_ref.dtype)


def _round_up(n, m):
    return ((n + m - 1) // m) * m


@functools.partial(jax.jit, static_argnames=("block_b",))
def mlp_forward(x, w1, b1, w2, b2, w3, b3, *, block_b=1024):
    B = x.shape[0]

    # Batch tile: at least 8 rows (sublane granule), at most block_b, and sized so
    # the grid has >=2 steps whenever B > 8 (lets v7x shard across both TCs) while
    # never padding a tiny batch up to a huge tile.
    TB = min(block_b, max(8, _round_up(-(-B // 2), 8)))
    Bp = _round_up(B, TB)

    # Only pad when the batch is ragged w.r.t. the tile; otherwise pass x through
    # untouched (no extra HBM round trip). Cast to bf16 happens inside the kernel.
    xp = x if Bp == B else jnp.pad(x, ((0, Bp - B), (0, 0)))

    # Weights in bf16 (halved HBM bytes, bf16-native MXU); biases in f32.
    w1b = w1.astype(jnp.bfloat16)                                      # (784, 128)
    b1r = b1.astype(jnp.float32).reshape(1, D_H1)                      # (1, 128)

    w2p = jnp.zeros((D_H1, LANES), jnp.bfloat16).at[:, :D_H2].set(w2.astype(jnp.bfloat16))
    b2p = jnp.zeros((1, LANES), jnp.float32).at[:, :D_H2].set(
        b2.astype(jnp.float32).reshape(1, D_H2))

    w3p = jnp.zeros((LANES, LANES), jnp.bfloat16).at[:D_H2, :D_OUT].set(
        w3.astype(jnp.bfloat16))
    b3p = jnp.zeros((1, LANES), jnp.float32).at[:, :D_OUT].set(
        b3.astype(jnp.float32).reshape(1, D_OUT))

    const = lambda i: (0, 0)   # weights/biases: same block every grid step (resident)

    out = pl.pallas_call(
        mlp_kernel,
        # bf16 output slab: lane-dense (TB, 128) stores, half the writeback bytes.
        out_shape=jax.ShapeDtypeStruct((Bp, LANES), jnp.bfloat16),
        grid_spec=pltpu.PrefetchScalarGridSpec(
            num_scalar_prefetch=0,
            grid=(Bp // TB,),
            in_specs=[
                pl.BlockSpec((TB, D_IN), lambda i: (i, 0)),   # x tile (pipelined)
                pl.BlockSpec((D_IN, D_H1), const),            # w1
                pl.BlockSpec((1, D_H1), const),               # b1
                pl.BlockSpec((D_H1, LANES), const),           # w2 (lane-padded)
                pl.BlockSpec((1, LANES), const),              # b2 (lane-padded)
                pl.BlockSpec((LANES, LANES), const),          # w3 (lane-padded)
                pl.BlockSpec((1, LANES), const),               # b3 (lane-padded)
            ],
            out_specs=pl.BlockSpec((TB, LANES), lambda i: (i, 0)),  # lane-dense store
        ),
        compiler_params=pltpu.CompilerParams(
            dimension_semantics=("parallel",),   # shard batch grid across TCs (v7x)
        ),
    )(xp, w1b, b1r, w2p, b2p, w3p, b3p)

    # Slice out the real (B, 10) result to match the nn.Module's output shape.
    return out[:B, :D_OUT]


def mlp_reference(x, w1, b1, w2, b2, w3, b3):
    h1 = jnp.maximum(x @ w1 + b1, 0.0)
    h2 = jnp.maximum(h1 @ w2 + b2, 0.0)
    logits = h2 @ w3 + b3
    return jax.nn.log_softmax(logits, axis=1)


def init_params(key):
    """Deterministic init mimicking PyTorch's default U(-1/sqrt(fan_in), +1/sqrt(fan_in))."""
    ks = jax.random.split(key, 6)

    def lin(kw, kb, fan_in, fan_out):
        bound = 1.0 / jnp.sqrt(fan_in)
        w = jax.random.uniform(kw, (fan_in, fan_out), jnp.float32, -bound, bound)
        b = jax.random.uniform(kb, (fan_out,), jnp.float32, -bound, bound)
        return w, b

    w1, b1 = lin(ks[0], ks[1], D_IN, D_H1)
    w2, b2 = lin(ks[2], ks[3], D_H1, D_H2)
    w3, b3 = lin(ks[4], ks[5], D_H2, D_OUT)
    return w1, b1, w2, b2, w3, b3


if __name__ == "__main__":
    key = jax.random.PRNGKey(0)
    k_x, k_p = jax.random.split(key)

    B = 8  # small demo batch -> a single 8-row tile (no padding, no wasted HBM/MXU work)
    x = jax.random.normal(k_x, (B, D_IN), jnp.float32)
    params = init_params(k_p)

    out = mlp_forward(x, *params)
    out = jax.block_until_ready(out)

    assert out.shape == (B, D_OUT)

    out_f32 = out.astype(jnp.float32)

    # sanity 1: log-softmax rows must exponentiate-sum to ~1 (bf16 output tolerance)
    row_sums = jnp.sum(jnp.exp(out_f32), axis=1)
    assert bool(jnp.all(jnp.abs(row_sums - 1.0) < 2e-2))

    # sanity 2: matches f32 reference within bf16 weight+output tolerance
    ref = mlp_reference(x, *params)
    assert bool(jnp.max(jnp.abs(out_f32 - ref)) < 0.25)

    print("KERNEL_OK")
</pallas_src>

<mosaic_0001>
module attributes {stable_mosaic.version = 11 : i64} {
  func.func @mlp_kernel(%arg0: i32, %arg1: memref<8x784xf32, #tpu.memory_space<vmem>>, %arg2: memref<784x128xbf16, #tpu.memory_space<vmem>>, %arg3: memref<1x128xf32, #tpu.memory_space<vmem>>, %arg4: memref<128x128xbf16, #tpu.memory_space<vmem>>, %arg5: memref<1x128xf32, #tpu.memory_space<vmem>>, %arg6: memref<128x128xbf16, #tpu.memory_space<vmem>>, %arg7: memref<1x128xf32, #tpu.memory_space<vmem>>, %arg8: memref<8x128xbf16, #tpu.memory_space<vmem>>) attributes {dimension_semantics = [#tpu.dimension_semantics<parallel>], iteration_bounds = array<i64: 1>, scalar_prefetch = 0 : i64, scratch_operands = 0 : i64, tpu.core_type = #tpu.core_type<tc>, window_params = [{transform_indices = @transform_0, window_bounds = array<i64: 8, 784>}, {pipeline_mode = #tpu.pipeline_mode<synchronous>, transform_indices = @transform_1, window_bounds = array<i64: 784, 128>}, {pipeline_mode = #tpu.pipeline_mode<synchronous>, transform_indices = @transform_2, window_bounds = array<i64: 1, 128>}, {pipeline_mode = #tpu.pipeline_mode<synchronous>, transform_indices = @transform_3, window_bounds = array<i64: 128, 128>}, {pipeline_mode = #tpu.pipeline_mode<synchronous>, transform_indices = @transform_4, window_bounds = array<i64: 1, 128>}, {pipeline_mode = #tpu.pipeline_mode<synchronous>, transform_indices = @transform_5, window_bounds = array<i64: 128, 128>}, {pipeline_mode = #tpu.pipeline_mode<synchronous>, transform_indices = @transform_6, window_bounds = array<i64: 1, 128>}, {transform_indices = @transform_7, window_bounds = array<i64: 8, 128>}]} {
    %c0 = arith.constant 0 : index
    %c0_0 = arith.constant 0 : index
    %0 = vector.load %arg1[%c0, %c0_0] : memref<8x784xf32, #tpu.memory_space<vmem>>, vector<8x784xf32>
    %1 = arith.truncf %0 : vector<8x784xf32> to vector<8x784xbf16>
    %c0_1 = arith.constant 0 : index
    %c0_2 = arith.constant 0 : index
    %2 = vector.load %arg2[%c0_1, %c0_2] : memref<784x128xbf16, #tpu.memory_space<vmem>>, vector<784x128xbf16>
    %cst = arith.constant dense<0.000000e+00> : vector<8x128xf32>
    %3 = tpu.matmul %1, %2, %cst {dimension_numbers = #tpu.dot_dimension_numbers<[1], [0], [0], [1], [0, 0, 1, 1], [], []>} : vector<8x784xbf16>, vector<784x128xbf16>, vector<8x128xf32> -> vector<8x128xf32>
    %c0_3 = arith.constant 0 : index
    %c0_4 = arith.constant 0 : index
    %4 = vector.load %arg3[%c0_3, %c0_4] : memref<1x128xf32, #tpu.memory_space<vmem>>, vector<1x128xf32>
    %5 = vector.broadcast %4 : vector<1x128xf32> to vector<8x128xf32>
    %6 = arith.addf %3, %5 : vector<8x128xf32>
    %cst_5 = arith.constant 0.000000e+00 : f32
    %7 = vector.broadcast %cst_5 : f32 to vector<8x128xf32>
    %8 = arith.maximumf %6, %7 : vector<8x128xf32>
    %9 = arith.truncf %8 : vector<8x128xf32> to vector<8x128xbf16>
    %c0_6 = arith.constant 0 : index
    %c0_7 = arith.constant 0 : index
    %10 = vector.load %arg4[%c0_6, %c0_7] : memref<128x128xbf16, #tpu.memory_space<vmem>>, vector<128x128xbf16>
    %cst_8 = arith.constant dense<0.000000e+00> : vector<8x128xf32>
    %11 = tpu.matmul %9, %10, %cst_8 {dimension_numbers = #tpu.dot_dimension_numbers<[1], [0], [0], [1], [0, 0, 1, 1], [], []>} : vector<8x128xbf16>, vector<128x128xbf16>, vector<8x128xf32> -> vector<8x128xf32>
    %c0_9 = arith.constant 0 : index
    %c0_10 = arith.constant 0 : index
    %12 = vector.load %arg5[%c0_9, %c0_10] : memref<1x128xf32, #tpu.memory_space<vmem>>, vector<1x128xf32>
    %13 = vector.broadcast %12 : vector<1x128xf32> to vector<8x128xf32>
    %14 = arith.addf %11, %13 : vector<8x128xf32>
    %cst_11 = arith.constant 0.000000e+00 : f32
    %15 = vector.broadcast %cst_11 : f32 to vector<8x128xf32>
    %16 = arith.maximumf %14, %15 : vector<8x128xf32>
    %17 = arith.truncf %16 : vector<8x128xf32> to vector<8x128xbf16>
    %c0_12 = arith.constant 0 : index
    %c0_13 = arith.constant 0 : index
    %18 = vector.load %arg6[%c0_12, %c0_13] : memref<128x128xbf16, #tpu.memory_space<vmem>>, vector<128x128xbf16>
    %cst_14 = arith.constant dense<0.000000e+00> : vector<8x128xf32>
    %19 = tpu.matmul %17, %18, %cst_14 {dimension_numbers = #tpu.dot_dimension_numbers<[1], [0], [0], [1], [0, 0, 1, 1], [], []>} : vector<8x128xbf16>, vector<128x128xbf16>, vector<8x128xf32> -> vector<8x128xf32>
    %c0_15 = arith.constant 0 : index
    %c0_16 = arith.constant 0 : index
    %20 = vector.load %arg7[%c0_15, %c0_16] : memref<1x128xf32, #tpu.memory_space<vmem>>, vector<1x128xf32>
    %21 = vector.broadcast %20 : vector<1x128xf32> to vector<8x128xf32>
    %22 = arith.addf %19, %21 : vector<8x128xf32>
    %23 = tpu.iota {dimensions = array<i32: 1>} : vector<8x128xi32>
    %c10_i32 = arith.constant 10 : i32
    %24 = vector.broadcast %c10_i32 : i32 to vector<8x128xi32>
    %25 = arith.cmpi slt, %23, %24 : vector<8x128xi32>
    %cst_17 = arith.constant -1.000000e+30 : f32
    %26 = vector.broadcast %cst_17 : f32 to vector<8x128xf32>
    %27 = arith.select %25, %22, %26 : vector<8x128xi1>, vector<8x128xf32>
    %cst_18 = arith.constant dense<0xFF800000> : vector<8xf32>
    %28 = vector.multi_reduction <maximumf>, %27, %cst_18 [1] : vector<8x128xf32> to vector<8xf32>
    %29 = vector.shape_cast %28 : vector<8xf32> to vector<8x1xf32>
    %30 = vector.broadcast %29 : vector<8x1xf32> to vector<8x128xf32>
    %31 = arith.subf %27, %30 : vector<8x128xf32>
    %32 = math.exp %31 : vector<8x128xf32>
    %cst_19 = arith.constant dense<0.000000e+00> : vector<8xf32>
    %33 = vector.multi_reduction <add>, %32, %cst_19 [1] : vector<8x128xf32> to vector<8xf32>
    %34 = vector.shape_cast %33 : vector<8xf32> to vector<8x1xf32>
    %35 = math.log %34 : vector<8x1xf32>
    %36 = vector.broadcast %35 : vector<8x1xf32> to vector<8x128xf32>
    %37 = arith.subf %31, %36 : vector<8x128xf32>
    %38 = arith.truncf %37 : vector<8x128xf32> to vector<8x128xbf16>
    %c0_20 = arith.constant 0 : index
    %c0_21 = arith.constant 0 : index
    %39 = vector.load %arg8[%c0_20, %c0_21] : memref<8x128xbf16, #tpu.memory_space<vmem>>, vector<8x128xbf16>
    tpu.vector_store %arg8[%c0_20, %c0_21], %38 {strides = array<i32>} : memref<8x128xbf16, #tpu.memory_space<vmem>>, vector<8x128xbf16>,
    return
  }
  func.func @transform_0(%arg0: i32) -> (i32, i32) {
    %c0_i32 = arith.constant 0 : i32
    %c0_i32_0 = arith.constant 0 : i32
    return %arg0, %c0_i32 : i32, i32
  }
  func.func @transform_1(%arg0: i32) -> (i32, i32) {
    %c0_i32 = arith.constant 0 : i32
    %c0_i32_0 = arith.constant 0 : i32
    %c0_i32_1 = arith.constant 0 : i32
    return %c0_i32, %c0_i32_0 : i32, i32
  }
  func.func @transform_2(%arg0: i32) -> (i32, i32) {
    %c0_i32 = arith.constant 0 : i32
    %c0_i32_0 = arith.constant 0 : i32
    %c0_i32_1 = arith.constant 0 : i32
    return %c0_i32, %c0_i32_0 : i32, i32
  }
  func.func @transform_3(%arg0: i32) -> (i32, i32) {
    %c0_i32 = arith.constant 0 : i32
    %c0_i32_0 = arith.constant 0 : i32
    %c0_i32_1 = arith.constant 0 : i32
    return %c0_i32, %c0_i32_0 : i32, i32
  }
  func.func @transform_4(%arg0: i32) -> (i32, i32) {
    %c0_i32 = arith.constant 0 : i32
    %c0_i32_0 = arith.constant 0 : i32
    %c0_i32_1 = arith.constant 0 : i32
    return %c0_i32, %c0_i32_0 : i32, i32
  }
  func.func @transform_5(%arg0: i32) -> (i32, i32) {
    %c0_i32 = arith.constant 0 : i32
    %c0_i32_0 = arith.constant 0 : i32
    %c0_i32_1 = arith.constant 0 : i32
    return %c0_i32, %c0_i32_0 : i32, i32
  }
  func.func @transform_6(%arg0: i32) -> (i32, i32) {
    %c0_i32 = arith.constant 0 : i32
    %c0_i32_0 = arith.constant 0 : i32
    %c0_i32_1 = arith.constant 0 : i32
    return %c0_i32, %c0_i32_0 : i32, i32
  }
  func.func @transform_7(%arg0: i32) -> (i32, i32) {
    %c0_i32 = arith.constant 0 : i32
    %c0_i32_0 = arith.constant 0 : i32
    return %arg0, %c0_i32 : i32, i32
  }
}

</mosaic_0001>

<llo_original>
// kernel: mlp_forward.1
$region0: #{mlp_forward.1}
  #allocation0 [shape = 'u32[]', space=smem, size = 0x4, offset = 0x4, fixed_abs, tag = 'smem constant byte address 0x4 - core index']
  #allocation1 [shape = 'u32[72,128]{1,0:T(1,128)}', space=vmem, size = 0x9000, scoped, tag = 'internal scratch']
  %s0 = inlined_call_operand.vmem [shape: f32[8,784], index: 0, kind: input, shape index: {}]
  %s1 = inlined_call_operand.vmem [shape: bf16[784,128], index: 1, kind: input, shape index: {}]
  %s2 = inlined_call_operand.vmem [shape: f32[1,128], index: 2, kind: input, shape index: {}]
  %s3 = inlined_call_operand.vmem [shape: bf16[128,128], index: 3, kind: input, shape index: {}]
  %s4 = inlined_call_operand.vmem [shape: f32[1,128], index: 4, kind: input, shape index: {}]
  %s5 = inlined_call_operand.vmem [shape: bf16[128,128], index: 5, kind: input, shape index: {}]
  %s6 = inlined_call_operand.vmem [shape: f32[1,128], index: 6, kind: input, shape index: {}]
  %s7 = inlined_call_operand.hbm [shape: bf16[8,128], index: 7, kind: output, shape index: {}]
  %s8 = sld [smem:[#allocation0]]
  $region38: #{mlp_forward.1} parent=0
    _
  %s10 = ssub.s32 1, %s8
  %s11 = scalar_select 0, %s10, %s8
  $region1: #{mlp_forward.1} parent=0
    #allocation2 [shape = 'u8[2048]{0}', space=vmem, size = 0x800, scoped, tag = 'output window, operand 0, single buffered']
    #allocation3 [shape = 's32[1]{0}', space=sflag, size = 0x4, scoped, tag = 'scoped memory for mlp_forward.1']
    %12 = vsyncpa [#allocation3], 0
    // Predicated region
    $region2: #{mlp_forward.1} parent=1 // pred_check
      _
    $region3: #{mlp_forward.1} parent=1 // pred_check_branch
      %14 = sbr.rel (0) target = $region5
    $region4: #{mlp_forward.1} parent=1 // pred_region
      _
    $region5: #{mlp_forward.1} parent=1 // pred_fallthru
      _
    // Predicated region
    $region6: #{mlp_forward.1} parent=1 // pred_check
      _
    $region7: #{mlp_forward.1} parent=1 // pred_check_branch
      %16 = sbr.rel (0) target = $region9
    $region8: #{mlp_forward.1} parent=1 // pred_region
      _
    $region9: #{mlp_forward.1} parent=1 // pred_fallthru
      _
    // Predicated region
    $region10: #{mlp_forward.1} parent=1 // pred_check
      _
    $region11: #{mlp_forward.1} parent=1 // pred_check_branch
      %18 = sbr.rel (0) target = $region13
    $region12: #{mlp_forward.1} parent=1 // pred_region
      _
    $region13: #{mlp_forward.1} parent=1 // pred_fallthru
      _
    // Predicated region
    $region14: #{mlp_forward.1} parent=1 // pred_check
      _
    $region15: #{mlp_forward.1} parent=1 // pred_check_branch
      %20 = sbr.rel (0) target = $region17
    $region16: #{mlp_forward.1} parent=1 // pred_region
      _
    $region17: #{mlp_forward.1} parent=1 // pred_fallthru
      _
    // Predicated region
    $region18: #{mlp_forward.1} parent=1 // pred_check
      _
    $region19: #{mlp_forward.1} parent=1 // pred_check_branch
      %22 = sbr.rel (0) target = $region21
    $region20: #{mlp_forward.1} parent=1 // pred_region
      _
    $region21: #{mlp_forward.1} parent=1 // pred_fallthru
      _
    // Predicated region
    $region22: #{mlp_forward.1} parent=1 // pred_check
      _
    $region23: #{mlp_forward.1} parent=1 // pred_check_branch
      %24 = sbr.rel (0) target = $region25
    $region24: #{mlp_forward.1} parent=1 // pred_region
      _
    $region25: #{mlp_forward.1} parent=1 // pred_fallthru
      _
    // Predicated region
    $region26: #{mlp_forward.1} parent=1 // pred_check
      _
    $region27: #{mlp_forward.1} parent=1 // pred_check_branch
      %26 = sbr.rel (0) target = $region29
    $region28: #{mlp_forward.1} parent=1 // pred_region
      _
    $region29: #{mlp_forward.1} parent=1 // pred_fallthru
      _
    %v28 = vld [vmem:[%s0] sm:$0xff]
    %v29 = vld [vmem:[%s0 + $0x8] sm:$0xff]
    %v30 = vld [vmem:[%s0 + $0x10] sm:$0xff]
    %v31 = vld [vmem:[%s0 + $0x18] sm:$0xff]
    %v32 = vld [vmem:[%s0 + $0x20] sm:$0xff]
    %v33 = vld [vmem:[%s0 + $0x28] sm:$0xff]
    %v34 = vld [vmem:[%s0 + $0x30] sm:$0xff]
    %v35 = vpack.c.bf16 %v28, %v28
    %v36 = vpack.c.bf16 %v29, %v29
    %v37 = vpack.c.bf16 %v30, %v30
    %v38 = vpack.c.bf16 %v31, %v31
    %v39 = vpack.c.bf16 %v32, %v32
    %v40 = vpack.c.bf16 %v33, %v33
    %v41 = vpack.c.bf16 %v34, %v34
    %v42 = vld [vmem:[%s1] sm:$0xf]
    %v43 = vld [vmem:[%s1 + $0x4] sm:$0xf]
    %v44 = vld [vmem:[%s1 + $0x8] sm:$0xf]
    %v45 = vld [vmem:[%s1 + $0xc] sm:$0xf]
    %v46 = vld [vmem:[%s1 + $0x10] sm:$0xf]
    %v47 = vld [vmem:[%s1 + $0x14] sm:$0xf]
    %v48 = vld [vmem:[%s1 + $0x18] sm:$0xf]
    %v49 = vld [vmem:[%s1 + $0x1c] sm:$0xf]
    %v50 = vld [vmem:[%s1 + $0x20] sm:$0xf]
    %v51 = vld [vmem:[%s1 + $0x24] sm:$0xf]
    %v52 = vld [vmem:[%s1 + $0x28] sm:$0xf]
    %v53 = vld [vmem:[%s1 + $0x2c] sm:$0xf]
    %v54 = vld [vmem:[%s1 + $0x30] sm:$0xf]
    %v55 = vld [vmem:[%s1 + $0x34] sm:$0xf]
    %v56 = vld [vmem:[%s1 + $0x38] sm:$0xf]
    %v57 = vld [vmem:[%s1 + $0x3c] sm:$0xf]
    %v58 = vld [vmem:[%s1 + $0x40] sm:$0xf]
    %v59 = vld [vmem:[%s1 + $0x44] sm:$0xf]
    %v60 = vld [vmem:[%s1 + $0x48] sm:$0xf]
    %v61 = vld [vmem:[%s1 + $0x4c] sm:$0xf]
    %v62 = vld [vmem:[%s1 + $0x50] sm:$0xf]
    %v63 = vld [vmem:[%s1 + $0x54] sm:$0xf]
    %v64 = vld [vmem:[%s1 + $0x58] sm:$0xf]
    %v65 = vld [vmem:[%s1 + $0x5c] sm:$0xf]
    %v66 = vld [vmem:[%s1 + $0x60] sm:$0xf]
    %v67 = vld [vmem:[%s1 + $0x64] sm:$0xf]
    %v68 = vld [vmem:[%s1 + $0x68] sm:$0xf]
    %v69 = vld [vmem:[%s1 + $0x6c] sm:$0xf]
    %v70 = vld [vmem:[%s1 + $0x70] sm:$0xf]
    %v71 = vld [vmem:[%s1 + $0x74] sm:$0xf]
    %v72 = vld [vmem:[%s1 + $0x78] sm:$0xf]
    %v73 = vld [vmem:[%s1 + $0x7c] sm:$0xf]
    %v74 = vld [vmem:[%s1 + $0x80] sm:$0xf]
    %v75 = vld [vmem:[%s1 + $0x84] sm:$0xf]
    %v76 = vld [vmem:[%s1 + $0x88] sm:$0xf]
    %v77 = vld [vmem:[%s1 + $0x8c] sm:$0xf]
    %v78 = vld [vmem:[%s1 + $0x90] sm:$0xf]
    %v79 = vld [vmem:[%s1 + $0x94] sm:$0xf]
    %v80 = vld [vmem:[%s1 + $0x98] sm:$0xf]
    %v81 = vld [vmem:[%s1 + $0x9c] sm:$0xf]
    %v82 = vld [vmem:[%s1 + $0xa0] sm:$0xf]
    %v83 = vld [vmem:[%s1 + $0xa4] sm:$0xf]
    %v84 = vld [vmem:[%s1 + $0xa8] sm:$0xf]
    %v85 = vld [vmem:[%s1 + $0xac] sm:$0xf]
    %v86 = vld [vmem:[%s1 + $0xb0] sm:$0xf]
    %v87 = vld [vmem:[%s1 + $0xb4] sm:$0xf]
    %v88 = vld [vmem:[%s1 + $0xb8] sm:$0xf]
    %v89 = vld [vmem:[%s1 + $0xbc] sm:$0xf]
    %v90 = vld [vmem:[%s1 + $0xc0] sm:$0xf]
    %v91 = vld [vmem:[%s1 + $0xc4] sm:$0xf]
    %v92 = vld [vmem:[%s1 + $0xc8] sm:$0xf]
    %v93 = vld [vmem:[%s1 + $0xcc] sm:$0xf]
    %v94 = vld [vmem:[%s1 + $0xd0] sm:$0xf]
    %v95 = vld [vmem:[%s1 + $0xd4] sm:$0xf]
    %v96 = vld [vmem:[%s1 + $0xd8] sm:$0xf]
    %v97 = vld [vmem:[%s1 + $0xdc] sm:$0xf]
    %v98 = vld [vmem:[%s1 + $0xe0] sm:$0xf]
    %v99 = vld [vmem:[%s1 + $0xe4] sm:$0xf]
    %v100 = vld [vmem:[%s1 + $0xe8] sm:$0xf]
    %v101 = vld [vmem:[%s1 + $0xec] sm:$0xf]
    %v102 = vld [vmem:[%s1 + $0xf0] sm:$0xf]
    %v103 = vld [vmem:[%s1 + $0xf4] sm:$0xf]
    %v104 = vld [vmem:[%s1 + $0xf8] sm:$0xf]
    %v105 = vld [vmem:[%s1 + $0xfc] sm:$0xf]
    %v106 = vld [vmem:[%s1 + $0x100] sm:$0xf]
    %v107 = vld [vmem:[%s1 + $0x104] sm:$0xf]
    %v108 = vld [vmem:[%s1 + $0x108] sm:$0xf]
    %v109 = vld [vmem:[%s1 + $0x10c] sm:$0xf]
    %v110 = vld [vmem:[%s1 + $0x110] sm:$0xf]
    %v111 = vld [vmem:[%s1 + $0x114] sm:$0xf]
    %v112 = vld [vmem:[%s1 + $0x118] sm:$0xf]
    %v113 = vld [vmem:[%s1 + $0x11c] sm:$0xf]
    %v114 = vld [vmem:[%s1 + $0x120] sm:$0xf]
    %v115 = vld [vmem:[%s1 + $0x124] sm:$0xf]
    %v116 = vld [vmem:[%s1 + $0x128] sm:$0xf]
    %v117 = vld [vmem:[%s1 + $0x12c] sm:$0xf]
    %v118 = vld [vmem:[%s1 + $0x130] sm:$0xf]
    %v119 = vld [vmem:[%s1 + $0x134] sm:$0xf]
    %v120 = vld [vmem:[%s1 + $0x138] sm:$0xf]
    %v121 = vld [vmem:[%s1 + $0x13c] sm:$0xf]
    %v122 = vld [vmem:[%s1 + $0x140] sm:$0xf]
    %v123 = vld [vmem:[%s1 + $0x144] sm:$0xf]
    %v124 = vld [vmem:[%s1 + $0x148] sm:$0xf]
    %v125 = vld [vmem:[%s1 + $0x14c] sm:$0xf]
    %v126 = vld [vmem:[%s1 + $0x150] sm:$0xf]
    %v127 = vld [vmem:[%s1 + $0x154] sm:$0xf]
    %v128 = vld [vmem:[%s1 + $0x158] sm:$0xf]
    %v129 = vld [vmem:[%s1 + $0x15c] sm:$0xf]
    %v130 = vld [vmem:[%s1 + $0x160] sm:$0xf]
    %v131 = vld [vmem:[%s1 + $0x164] sm:$0xf]
    %v132 = vld [vmem:[%s1 + $0x168] sm:$0xf]
    %v133 = vld [vmem:[%s1 + $0x16c] sm:$0xf]
    %v134 = vld [vmem:[%s1 + $0x170] sm:$0xf]
    %v135 = vld [vmem:[%s1 + $0x174] sm:$0xf]
    %v136 = vld [vmem:[%s1 + $0x178] sm:$0xf]
    %v137 = vld [vmem:[%s1 + $0x17c] sm:$0xf]
    %v138 = vld [vmem:[%s1 + $0x180] sm:$0xf]
    %v139 = vld [vmem:[%s1 + $0x184] sm:$0xf]
    %v140 = vld [vmem:[%s2] sm:$0x1]
    %v142 = vperm.slane %v140, 0
    %v242 = vunpack.c.l.b16 %v42
    %v243 = vunpack.c.l.b16 %v43
    %v244 = vunpack.c.l.b16 %v44
    %v245 = vunpack.c.l.b16 %v45
    %v246 = vunpack.c.l.b16 %v46
    %v247 = vunpack.c.l.b16 %v47
    %v248 = vunpack.c.l.b16 %v48
    %v249 = vunpack.c.l.b16 %v49
    %v250 = vunpack.c.l.b16 %v50
    %v251 = vunpack.c.l.b16 %v51
    %v252 = vunpack.c.l.b16 %v52
    %v253 = vunpack.c.l.b16 %v53
    %v254 = vunpack.c.l.b16 %v54
    %v255 = vunpack.c.l.b16 %v55
    %v256 = vunpack.c.l.b16 %v56
    %v257 = vunpack.c.l.b16 %v57
    %v258 = vunpack.c.l.b16 %v58
    %v259 = vunpack.c.l.b16 %v59
    %v260 = vunpack.c.l.b16 %v60
    %v261 = vunpack.c.l.b16 %v61
    %v262 = vunpack.c.l.b16 %v62
    %v263 = vunpack.c.l.b16 %v63
    %v264 = vunpack.c.l.b16 %v64
    %v265 = vunpack.c.l.b16 %v65
    %v266 = vunpack.c.l.b16 %v66
    %v267 = vunpack.c.l.b16 %v67
    %v268 = vunpack.c.l.b16 %v68
    %v269 = vunpack.c.l.b16 %v69
    %v270 = vunpack.c.l.b16 %v70
    %v271 = vunpack.c.l.b16 %v71
    %v272 = vunpack.c.l.b16 %v72
    %v273 = vunpack.c.l.b16 %v73
    %v274 = vunpack.c.l.b16 %v74
    %v275 = vunpack.c.l.b16 %v75
    %v276 = vunpack.c.l.b16 %v76
    %v277 = vunpack.c.l.b16 %v77
    %v278 = vunpack.c.l.b16 %v78
    %v279 = vunpack.c.l.b16 %v79
    %v280 = vunpack.c.l.b16 %v80
    %v281 = vunpack.c.l.b16 %v81
    %v282 = vunpack.c.l.b16 %v82
    %v283 = vunpack.c.l.b16 %v83
    %v284 = vunpack.c.l.b16 %v84
    %v285 = vunpack.c.l.b16 %v85
    %v286 = vunpack.c.l.b16 %v86
    %v287 = vunpack.c.l.b16 %v87
    %v288 = vunpack.c.l.b16 %v88
    %v289 = vunpack.c.l.b16 %v89
    %v290 = vunpack.c.l.b16 %v90
    %v291 = vunpack.c.l.b16 %v91
    %v292 = vunpack.c.l.b16 %v92
    %v293 = vunpack.c.l.b16 %v93
    %v294 = vunpack.c.l.b16 %v94
    %v295 = vunpack.c.l.b16 %v95
    %v296 = vunpack.c.l.b16 %v96
    %v297 = vunpack.c.l.b16 %v97
    %v298 = vunpack.c.l.b16 %v98
    %v299 = vunpack.c.l.b16 %v99
    %v300 = vunpack.c.l.b16 %v100
    %v301 = vunpack.c.l.b16 %v101
    %v302 = vunpack.c.l.b16 %v102
    %v303 = vunpack.c.l.b16 %v103
    %v304 = vunpack.c.l.b16 %v104
    %v305 = vunpack.c.l.b16 %v105
    %v306 = vunpack.c.l.b16 %v106
    %v307 = vunpack.c.l.b16 %v107
    %v308 = vunpack.c.l.b16 %v108
    %v309 = vunpack.c.l.b16 %v109
    %v310 = vunpack.c.l.b16 %v110
    %v311 = vunpack.c.l.b16 %v111
    %v312 = vunpack.c.l.b16 %v112
    %v313 = vunpack.c.l.b16 %v113
    %v314 = vunpack.c.l.b16 %v114
    %v315 = vunpack.c.l.b16 %v115
    %v316 = vunpack.c.l.b16 %v116
    %v317 = vunpack.c.l.b16 %v117
    %v318 = vunpack.c.l.b16 %v118
    %v319 = vunpack.c.l.b16 %v119
    %v320 = vunpack.c.l.b16 %v120
    %v321 = vunpack.c.l.b16 %v121
    %v322 = vunpack.c.l.b16 %v122
    %v323 = vunpack.c.l.b16 %v123
    %v324 = vunpack.c.l.b16 %v124
    %v325 = vunpack.c.l.b16 %v125
    %v326 = vunpack.c.l.b16 %v126
    %v327 = vunpack.c.l.b16 %v127
    %v328 = vunpack.c.l.b16 %v128
    %v329 = vunpack.c.l.b16 %v129
    %v330 = vunpack.c.l.b16 %v130
    %v331 = vunpack.c.l.b16 %v131
    %v332 = vunpack.c.l.b16 %v132
    %v333 = vunpack.c.l.b16 %v133
    %v334 = vunpack.c.l.b16 %v134
    %v335 = vunpack.c.l.b16 %v135
    %v336 = vunpack.c.l.b16 %v136
    %v337 = vunpack.c.l.b16 %v137
    %v338 = vunpack.c.l.b16 %v138
    %v339 = vunpack.c.l.b16 %v139
    %v340 = vpack.c.b16 %v243, %v242
    %v341 = vpack.c.b16 %v245, %v244
    %v342 = vpack.c.b16 %v247, %v246
    %v343 = vpack.c.b16 %v249, %v248
    %v344 = vpack.c.b16 %v251, %v250
    %v345 = vpack.c.b16 %v253, %v252
    %v346 = vpack.c.b16 %v255, %v254
    %v347 = vpack.c.b16 %v257, %v256
    %v348 = vpack.c.b16 %v259, %v258
    %v349 = vpack.c.b16 %v261, %v260
    %v350 = vpack.c.b16 %v263, %v262
    %v351 = vpack.c.b16 %v265, %v264
    %v352 = vpack.c.b16 %v267, %v266
    %v353 = vpack.c.b16 %v269, %v268
    %v354 = vpack.c.b16 %v271, %v270
    %v355 = vpack.c.b16 %v273, %v272
    %v356 = vpack.c.b16 %v275, %v274
    %v357 = vpack.c.b16 %v277, %v276
    %v358 = vpack.c.b16 %v279, %v278
    %v359 = vpack.c.b16 %v281, %v280
    %v360 = vpack.c.b16 %v283, %v282
    %v361 = vpack.c.b16 %v285, %v284
    %v362 = vpack.c.b16 %v287, %v286
    %v363 = vpack.c.b16 %v289, %v288
    %v364 = vpack.c.b16 %v291, %v290
    %v365 = vpack.c.b16 %v293, %v292
    %v366 = vpack.c.b16 %v295, %v294
    %v367 = vpack.c.b16 %v297, %v296
    %v368 = vpack.c.b16 %v299, %v298
    %v369 = vpack.c.b16 %v301, %v300
    %v370 = vpack.c.b16 %v303, %v302
    %v371 = vpack.c.b16 %v305, %v304
    %v372 = vpack.c.b16 %v307, %v306
    %v373 = vpack.c.b16 %v309, %v308
    %v374 = vpack.c.b16 %v311, %v310
    %v375 = vpack.c.b16 %v313, %v312
    %v376 = vpack.c.b16 %v315, %v314
    %v377 = vpack.c.b16 %v317, %v316
    %v378 = vpack.c.b16 %v319, %v318
    %v379 = vpack.c.b16 %v321, %v320
    %v380 = vpack.c.b16 %v323, %v322
    %v381 = vpack.c.b16 %v325, %v324
    %v382 = vpack.c.b16 %v327, %v326
    %v383 = vpack.c.b16 %v329, %v328
    %v384 = vpack.c.b16 %v331, %v330
    %v385 = vpack.c.b16 %v333, %v332
    %v386 = vpack.c.b16 %v335, %v334
    %v387 = vpack.c.b16 %v337, %v336
    %v388 = vpack.c.b16 %v339, %v338
    %vm438 = vcmask 130048
    %v440 = vsel %vm438, %v41, 0
    %442 = vmatpush.bf16.msra.mxu0 %v347
    %443 = vmatpush.bf16.msra.mxu0 %v346
    %444 = vmatpush.bf16.msra.mxu0 %v345
    %445 = vmatpush.bf16.msra.mxu0 %v344
    %446 = vmatpush.bf16.msra.mxu0 %v343
    %447 = vmatpush.bf16.msra.mxu0 %v342
    %448 = vmatpush.bf16.msra.mxu0 %v341
    %449 = vmatpush.bf16.msra.mxu0 %v340
    %450 = vmatmul.bf16.gmra.mxu0 %v35
    %v451 = vpop.f32.mrf.mxu0
    %v452 = vadd.f32 %v142, %v451
    %v453 = vpop.f32.mrf.mxu0
    %454 = vdwg.mxu0
    %455 = vmatpush.bf16.msra.mxu0 %v355
    %456 = vmatpush.bf16.msra.mxu0 %v354
    %457 = vmatpush.bf16.msra.mxu0 %v353
    %458 = vmatpush.bf16.msra.mxu0 %v352
    %459 = vmatpush.bf16.msra.mxu0 %v351
    %460 = vmatpush.bf16.msra.mxu0 %v350
    %461 = vmatpush.bf16.msra.mxu0 %v349
    %462 = vmatpush.bf16.msra.mxu0 %v348
    %463 = vmatmul.bf16.gmra.mxu0 %v36
    %v464 = vpop.f32.mrf.mxu0
    %v465 = vadd.f32 %v452, %v464
    %v466 = vpop.f32.mrf.mxu0
    %467 = vdwg.mxu0
    %468 = vmatpush.bf16.msra.mxu0 %v363
    %469 = vmatpush.bf16.msra.mxu0 %v362
    %470 = vmatpush.bf16.msra.mxu0 %v361
    %471 = vmatpush.bf16.msra.mxu0 %v360
    %472 = vmatpush.bf16.msra.mxu0 %v359
    %473 = vmatpush.bf16.msra.mxu0 %v358
    %474 = vmatpush.bf16.msra.mxu0 %v357
    %475 = vmatpush.bf16.msra.mxu0 %v356
    %476 = vmatmul.bf16.gmra.mxu0 %v37
    %v477 = vpop.f32.mrf.mxu0
    %v478 = vadd.f32 %v465, %v477
    %v479 = vpop.f32.mrf.mxu0
    %480 = vdwg.mxu0
    %481 = vmatpush.bf16.msra.mxu0 %v371
    %482 = vmatpush.bf16.msra.mxu0 %v370
    %483 = vmatpush.bf16.msra.mxu0 %v369
    %484 = vmatpush.bf16.msra.mxu0 %v368
    %485 = vmatpush.bf16.msra.mxu0 %v367
    %486 = vmatpush.bf16.msra.mxu0 %v366
    %487 = vmatpush.bf16.msra.mxu0 %v365
    %488 = vmatpush.bf16.msra.mxu0 %v364
    %489 = vmatmul.bf16.gmra.mxu0 %v38
    %v490 = vpop.f32.mrf.mxu0
    %v491 = vadd.f32 %v478, %v490
    %v492 = vpop.f32.mrf.mxu0
    %493 = vdwg.mxu0
    %494 = vmatpush.bf16.msra.mxu0 %v379
    %495 = vmatpush.bf16.msra.mxu0 %v378
    %496 = vmatpush.bf16.msra.mxu0 %v377
    %497 = vmatpush.bf16.msra.mxu0 %v376
    %498 = vmatpush.bf16.msra.mxu0 %v375
    %499 = vmatpush.bf16.msra.mxu0 %v374
    %500 = vmatpush.bf16.msra.mxu0 %v373
    %501 = vmatpush.bf16.msra.mxu0 %v372
    %502 = vmatmul.bf16.gmra.mxu0 %v39
    %v503 = vpop.f32.mrf.mxu0
    %v504 = vadd.f32 %v491, %v503
    %v505 = vpop.f32.mrf.mxu0
    %506 = vdwg.mxu0
    %507 = vmatpush.bf16.msra.mxu0 %v387
    %508 = vmatpush.bf16.msra.mxu0 %v386
    %509 = vmatpush.bf16.msra.mxu0 %v385
    %510 = vmatpush.bf16.msra.mxu0 %v384
    %511 = vmatpush.bf16.msra.mxu0 %v383
    %512 = vmatpush.bf16.msra.mxu0 %v382
    %513 = vmatpush.bf16.msra.mxu0 %v381
    %514 = vmatpush.bf16.msra.mxu0 %v380
    %515 = vmatmul.bf16.gmra.mxu0 %v40
    %v516 = vpop.f32.mrf.mxu0
    %v517 = vadd.f32 %v504, %v516
    %v518 = vpop.f32.mrf.mxu0
    %519 = vdwg.mxu0
    %520 = vmatpush.bf16.msra.mxu0 0
    %521 = vmatpush.bf16.msra.mxu0 0
    %522 = vmatpush.bf16.msra.mxu0 0
    %523 = vmatpush.bf16.msra.mxu0 0
    %524 = vmatpush.bf16.msra.mxu0 0
    %525 = vmatpush.bf16.msra.mxu0 0
    %526 = vmatpush.bf16.msra.mxu0 0
    %527 = vmatpush.bf16.msra.mxu0 %v388
    %528 = vmatmul.bf16.gmra.mxu0 %v440
    %v529 = vpop.f32.mrf.mxu0
    %v530 = vadd.f32 %v517, %v529
    %v531 = vpop.f32.mrf.mxu0
    %532 = vdwg.mxu0
    %v533 = vmax.f32 %v530, 0.0
    %v534 = vpack.c.bf16 %v533, %v533
    %v535 = vld [vmem:[%s3] sm:$0xf]
    %v536 = vld [vmem:[%s3 + $0x4] sm:$0xf]
    %v537 = vld [vmem:[%s3 + $0x8] sm:$0xf]
    %v538 = vld [vmem:[%s3 + $0xc] sm:$0xf]
    %v539 = vld [vmem:[%s3 + $0x10] sm:$0xf]
    %v540 = vld [vmem:[%s3 + $0x14] sm:$0xf]
    %v541 = vld [vmem:[%s3 + $0x18] sm:$0xf]
    %v542 = vld [vmem:[%s3 + $0x1c] sm:$0xf]
    %v543 = vld [vmem:[%s3 + $0x20] sm:$0xf]
    %v544 = vld [vmem:[%s3 + $0x24] sm:$0xf]
    %v545 = vld [vmem:[%s3 + $0x28] sm:$0xf]
    %v546 = vld [vmem:[%s3 + $0x2c] sm:$0xf]
    %v547 = vld [vmem:[%s3 + $0x30] sm:$0xf]
    %v548 = vld [vmem:[%s3 + $0x34] sm:$0xf]
    %v549 = vld [vmem:[%s3 + $0x38] sm:$0xf]
    %v550 = vld [vmem:[%s3 + $0x3c] sm:$0xf]
    %v551 = vld [vmem:[%s4] sm:$0x1]
    %v553 = vperm.slane %v551, 0
    %v571 = vunpack.c.l.b16 %v535
    %v572 = vunpack.c.l.b16 %v536
    %v573 = vunpack.c.l.b16 %v537
    %v574 = vunpack.c.l.b16 %v538
    %v575 = vunpack.c.l.b16 %v539
    %v576 = vunpack.c.l.b16 %v540
    %v577 = vunpack.c.l.b16 %v541
    %v578 = vunpack.c.l.b16 %v542
    %v579 = vunpack.c.l.b16 %v543
    %v580 = vunpack.c.l.b16 %v544
    %v581 = vunpack.c.l.b16 %v545
    %v582 = vunpack.c.l.b16 %v546
    %v583 = vunpack.c.l.b16 %v547
    %v584 = vunpack.c.l.b16 %v548
    %v585 = vunpack.c.l.b16 %v549
    %v586 = vunpack.c.l.b16 %v550
    %v587 = vpack.c.b16 %v572, %v571
    %v588 = vpack.c.b16 %v574, %v573
    %v589 = vpack.c.b16 %v576, %v575
    %v590 = vpack.c.b16 %v578, %v577
    %v591 = vpack.c.b16 %v580, %v579
    %v592 = vpack.c.b16 %v582, %v581
    %v593 = vpack.c.b16 %v584, %v583
    %v594 = vpack.c.b16 %v586, %v585
    %603 = vmatpush.bf16.msra.mxu0 %v594
    %604 = vmatpush.bf16.msra.mxu0 %v593
    %605 = vmatpush.bf16.msra.mxu0 %v592
    %606 = vmatpush.bf16.msra.mxu0 %v591
    %607 = vmatpush.bf16.msra.mxu0 %v590
    %608 = vmatpush.bf16.msra.mxu0 %v589
    %609 = vmatpush.bf16.msra.mxu0 %v588
    %610 = vmatpush.bf16.msra.mxu0 %v587
    %611 = vmatmul.bf16.gmra.mxu0 %v534
    %v612 = vpop.f32.mrf.mxu0
    %v613 = vadd.f32 %v553, %v612
    %v614 = vpop.f32.mrf.mxu0
    %615 = vdwg.mxu0
    %v616 = vmax.f32 %v613, 0.0
    %v617 = vpack.c.bf16 %v616, %v616
    %v618 = vld [vmem:[%s5] sm:$0xf]
    %v619 = vld [vmem:[%s5 + $0x4] sm:$0xf]
    %v620 = vld [vmem:[%s5 + $0x8] sm:$0xf]
    %v621 = vld [vmem:[%s5 + $0xc] sm:$0xf]
    %v622 = vld [vmem:[%s5 + $0x10] sm:$0xf]
    %v623 = vld [vmem:[%s5 + $0x14] sm:$0xf]
    %v624 = vld [vmem:[%s5 + $0x18] sm:$0xf]
    %v625 = vld [vmem:[%s5 + $0x1c] sm:$0xf]
    %v626 = vld [vmem:[%s5 + $0x20] sm:$0xf]
    %v627 = vld [vmem:[%s5 + $0x24] sm:$0xf]
    %v628 = vld [vmem:[%s5 + $0x28] sm:$0xf]
    %v629 = vld [vmem:[%s5 + $0x2c] sm:$0xf]
    %v630 = vld [vmem:[%s5 + $0x30] sm:$0xf]
    %v631 = vld [vmem:[%s5 + $0x34] sm:$0xf]
    %v632 = vld [vmem:[%s5 + $0x38] sm:$0xf]
    %v633 = vld [vmem:[%s5 + $0x3c] sm:$0xf]
    %v634 = vld [vmem:[%s6] sm:$0x1]
    %v636 = vperm.slane %v634, 0
    %v654 = vunpack.c.l.b16 %v618
    %v655 = vunpack.c.l.b16 %v619
    %v656 = vunpack.c.l.b16 %v620
    %v657 = vunpack.c.l.b16 %v621
    %v658 = vunpack.c.l.b16 %v622
    %v659 = vunpack.c.l.b16 %v623
    %v660 = vunpack.c.l.b16 %v624
    %v661 = vunpack.c.l.b16 %v625
    %v662 = vunpack.c.l.b16 %v626
    %v663 = vunpack.c.l.b16 %v627
    %v664 = vunpack.c.l.b16 %v628
    %v665 = vunpack.c.l.b16 %v629
    %v666 = vunpack.c.l.b16 %v630
    %v667 = vunpack.c.l.b16 %v631
    %v668 = vunpack.c.l.b16 %v632
    %v669 = vunpack.c.l.b16 %v633
    %v670 = vpack.c.b16 %v655, %v654
    %v671 = vpack.c.b16 %v657, %v656
    %v672 = vpack.c.b16 %v659, %v658
    %v673 = vpack.c.b16 %v661, %v660
    %v674 = vpack.c.b16 %v663, %v662
    %v675 = vpack.c.b16 %v665, %v664
    %v676 = vpack.c.b16 %v667, %v666
    %v677 = vpack.c.b16 %v669, %v668
    %686 = vmatpush.bf16.msra.mxu0 %v677
    %687 = vmatpush.bf16.msra.mxu0 %v676
    %688 = vmatpush.bf16.msra.mxu0 %v675
    %689 = vmatpush.bf16.msra.mxu0 %v674
    %690 = vmatpush.bf16.msra.mxu0 %v673
    %691 = vmatpush.bf16.msra.mxu0 %v672
    %692 = vmatpush.bf16.msra.mxu0 %v671
    %693 = vmatpush.bf16.msra.mxu0 %v670
    %694 = vmatmul.bf16.gmra.mxu0 %v617
    %v695 = vpop.f32.mrf.mxu0
    %v696 = vadd.f32 %v636, %v695
    %v697 = vpop.f32.mrf.mxu0
    %698 = vdwg.mxu0
    %v699 = vlaneseq
    %v700 = vand.u32 %v699, 127
    %vm701 = vcmp.lt.s32.totalorder %v700, 10
    %v702 = vsel %vm701, %v696, -1e+30
    %703 = vmax.xlane.f32.xlu0 %v702
    %v704 = vpop.xlane.xlu0 %703
    %v705 = vsub.f32 %v702, %v704
    %v706 = vmul.f32 %v705, 1.442695
    %v707 = vpow.pop %v706
    %708 = vadd.xlane.f32.xlu0 %v707
    %v709 = vpop.xlane.xlu0 %708
    %v710 = vlog2.pop %v709
    %v711 = vmul.f32 %v710, 0.6931472
    %v712 = vsub.f32 %v705, %v711
    %v713 = vpack.c.bf16 %v712, %v712
    %714 = vst [vmem:[#allocation2] sm:$0xf] %v713
    // Predicated region
    $region30: #{mlp_forward.1} parent=1 // pred_check
      _
    $region31: #{mlp_forward.1} parent=1 // pred_check_branch
      %716 = sbr.rel (0) target = $region33
    $region32: #{mlp_forward.1} parent=1 // pred_region
      %718 = vsyncadd [#allocation3], 0
      %s720 = sshll.u32 [#allocation2], 4
      %s721 = int_to_ptr.vmem [resolvable:$true] %s720
      %s722 = sshll.u32 %s7, 4
      %s723 = int_to_ptr.hbm [resolvable:$true] %s722
      %725 = dma.vmem_to_hbm [thread:$0]  %s721, 64, %s723, [#allocation3]
    $region33: #{mlp_forward.1} parent=1 // pred_fallthru
      _
    // Predicated region
    $region34: #{mlp_forward.1} parent=1 // pred_check
      _
    $region35: #{mlp_forward.1} parent=1 // pred_check_branch
      %727 = sbr.rel (0) target = $region37
    $region36: #{mlp_forward.1} parent=1 // pred_region
      %729 = dma.done [#allocation3], 64
    $region37: #{mlp_forward.1} parent=1 // pred_fallthru
      _
    %730 = vsyncpa [#allocation3], 1

</llo_original>
